<compile_context>
chip_gen: v5e
topology: v5e:2x2
jax: 0.10.0
libtpu: 0.0.40
codegen_flags: <defaults>
</compile_context>

<pallas_src>
import numpy as np
import jax
import jax.numpy as jnp
from jax.experimental import pallas as pl
from jax.experimental.pallas import tpu as pltpu


def split_layer(total_channels, num_groups):
    split = [int(np.ceil(total_channels / num_groups)) for _ in range(num_groups)]
    split[num_groups - 1] += total_channels - sum(split)
    return split


def _pick_spatial_tile(P, max_tile=2048):
    """Largest multiple-of-128 divisor of P that is <= max_tile, else the full dim."""
    if P % 128 != 0:
        return P
    best = None
    for t in range(128, min(P, max_tile) + 1, 128):
        if P % t == 0:
            best = t
    return best if best is not None else P


def _grouped_matmul_kernel(x_ref, w_ref, o_ref):
    # x_ref: (1, 1, K, TP)   im2col'd activations for one (chunk, batch, spatial tile)
    # w_ref: (1, Cout_g, K)  this chunk's filters flattened over (Cin_g, kh, kw)
    # o_ref: (1, 1, Cout_g, TP)
    o_ref[0, 0] = jnp.dot(
        w_ref[0], x_ref[0, 0], preferred_element_type=jnp.float32
    ).astype(o_ref.dtype)


def grouped_pointwise_matmul(xcol, wmat):
    """xcol: (N, G, K, P), wmat: (G, Cout_g, K)  ->  (N, G, Cout_g, P)."""
    N, G, K, P = xcol.shape
    Gw, Cout_g, Kw = wmat.shape
    assert Gw == G and Kw == K
    TP = _pick_spatial_tile(P)
    S = P // TP
    return pl.pallas_call(
        _grouped_matmul_kernel,
        out_shape=jax.ShapeDtypeStruct((N, G, Cout_g, P), xcol.dtype),
        grid_spec=pltpu.PrefetchScalarGridSpec(
            num_scalar_prefetch=0,
            grid=(G, N, S),  # chunk outermost -> weight block revisited (no re-DMA)
            in_specs=[
                pl.BlockSpec((1, 1, K, TP), lambda g, n, s: (n, g, 0, s)),
                pl.BlockSpec((1, Cout_g, K), lambda g, n, s: (g, 0, 0)),
            ],
            out_specs=pl.BlockSpec((1, 1, Cout_g, TP), lambda g, n, s: (n, g, 0, s)),
        ),
        compiler_params=pltpu.CompilerParams(
            dimension_semantics=("parallel", "parallel", "parallel"),
            vmem_limit_bytes=32 * 1024 * 1024,
        ),
    )(xcol, wmat)


def _im2col(x, k):
    """x: (N, C, H, W) -> (N, C*k*k, Ho*Wo), q = c*k*k + kh*k + kw (matches the
    PyTorch OIHW weight flattened as (Cout, Cin*k*k)). Free reshape when k == 1."""
    N, C, H, W = x.shape
    Ho, Wo = H - k + 1, W - k + 1
    if k == 1:
        return x.reshape(N, C, H * W)
    # TODO(synk): for k > 1 the im2col is glue JAX (k^2 x input HBM traffic);
    # fold it into the kernel with per-tap Ref slices if k > 1 becomes hot.
    taps = [x[:, :, kh:kh + Ho, kw:kw + Wo] for kh in range(k) for kw in range(k)]
    patches = jnp.stack(taps, axis=2)          # (N, C, k*k, Ho, Wo)
    return patches.reshape(N, C * k * k, Ho * Wo)


class GroupConv2DPallas:
    """JAX/Pallas port of GroupConv2D (bias=False)."""

    def __init__(self, in_channels, out_channels, kernel_size=1, n_chunks=1,
                 bias=False, key=None):
        assert not bias, "reference module is used with bias=False"
        self.in_channels = in_channels
        self.out_channels = out_channels
        self.kernel_size = kernel_size
        self.n_chunks = n_chunks
        self.split_in_channels = split_layer(in_channels, n_chunks)
        self.split_out_channels = split_layer(out_channels, n_chunks)
        if key is None:
            key = jax.random.PRNGKey(0)
        k = kernel_size
        self.weights = []
        for ci, co in zip(self.split_in_channels, self.split_out_channels):
            key, sub = jax.random.split(key)
            bound = 1.0 / np.sqrt(max(ci * k * k, 1))  # ~Conv2d kaiming-uniform
            w = jax.random.uniform(sub, (co, ci, k, k), jnp.float32, -bound, bound)
            self.weights.append(w)

    def __call__(self, x):
        N, C, H, W = x.shape
        assert C == self.in_channels
        k = self.kernel_size
        Ho, Wo = H - k + 1, W - k + 1
        P = Ho * Wo
        uniform = (len(set(self.split_in_channels)) == 1
                   and len(set(self.split_out_channels)) == 1)
        if uniform:
            G = self.n_chunks
            ci = self.split_in_channels[0]
            co = self.split_out_channels[0]
            K = ci * k * k
            # Channels are chunk-contiguous, so splitting into the chunk axis is a
            # free reshape (no data movement).
            xcol = _im2col(x, k).reshape(N, G, K, P)
            wmat = jnp.stack([w.reshape(co, K) for w in self.weights], axis=0)
            y = grouped_pointwise_matmul(xcol, wmat)       # (N, G, co, P)
            return y.reshape(N, G * co, Ho, Wo)
        # Unequal chunk widths (channels % n_chunks != 0): one lane-dense call per
        # chunk, then concatenate (static block shapes differ across chunks).
        outs = []
        start = 0
        for ci, co, w in zip(self.split_in_channels, self.split_out_channels,
                             self.weights):
            xs = x[:, start:start + ci]
            xcol = _im2col(xs, k)[:, None]                 # (N, 1, ci*k*k, P)
            wmat = w.reshape(1, co, ci * k * k)
            y = grouped_pointwise_matmul(xcol, wmat)       # (N, 1, co, P)
            outs.append(y.reshape(N, co, Ho, Wo))
            start += ci
        return jnp.concatenate(outs, axis=1)


def _reference_groupconv(x, module):
    """Pure-JAX reference mirroring the PyTorch forward (per-chunk Conv2d + cat)."""
    outs = []
    start = 0
    for ci, co, w in zip(module.split_in_channels, module.split_out_channels,
                         module.weights):
        xs = x[:, start:start + ci]
        y = jax.lax.conv_general_dilated(
            xs, w, window_strides=(1, 1), padding="VALID",
            dimension_numbers=("NCHW", "OIHW", "NCHW"),
            precision=jax.lax.Precision.HIGHEST)
        outs.append(y)
        start += ci
    return jnp.concatenate(outs, axis=1)


if __name__ == "__main__":
    key = jax.random.PRNGKey(0)
    kx, kx2, kw1, kw2, kw3, kw4 = jax.random.split(key, 6)

    def check(module, x):
        out = jax.block_until_ready(module(x))
        ref = jax.block_until_ready(_reference_groupconv(x, module))
        assert out.shape == ref.shape
        np.testing.assert_allclose(np.asarray(out), np.asarray(ref),
                                   rtol=2e-3, atol=2e-3)

    x = jax.random.normal(kx, (2, 4, 16, 16), jnp.float32)

    # 1) module default: pointwise (k=1), chunked — fully fused single pallas_call
    check(GroupConv2DPallas(4, 4, kernel_size=1, n_chunks=2, key=kw1), x)

    # 2) n_chunks == 1 (single Conv2d path)
    check(GroupConv2DPallas(4, 8, kernel_size=1, n_chunks=1, key=kw2), x)

    # 3) kernel_size > 1 (im2col path, padding=0 like nn.Conv2d default)
    check(GroupConv2DPallas(4, 4, kernel_size=3, n_chunks=2, key=kw3), x)

    # 4) unequal channel splits (fallback path)
    x5 = jax.random.normal(kx2, (2, 5, 16, 16), jnp.float32)
    check(GroupConv2DPallas(5, 5, kernel_size=1, n_chunks=2, key=kw4), x5)

    print("KERNEL_OK")
</pallas_src>

<mosaic_0001>
module attributes {stable_mosaic.version = 11 : i64} {
  func.func @_grouped_matmul_kernel(%arg0: i32, %arg1: i32, %arg2: i32, %arg3: memref<1x1x2x256xf32, #tpu.memory_space<vmem>>, %arg4: memref<1x2x2xf32, #tpu.memory_space<vmem>>, %arg5: memref<1x1x2x256xf32, #tpu.memory_space<vmem>>) attributes {dimension_semantics = [#tpu.dimension_semantics<parallel>, #tpu.dimension_semantics<parallel>, #tpu.dimension_semantics<parallel>], iteration_bounds = array<i64: 2, 2, 1>, scalar_prefetch = 0 : i64, scratch_operands = 0 : i64, tpu.core_type = #tpu.core_type<tc>, window_params = [{transform_indices = @transform_0, window_bounds = array<i64: 1, 1, 2, 256>}, {transform_indices = @transform_1, window_bounds = array<i64: 1, 2, 2>}, {transform_indices = @transform_2, window_bounds = array<i64: 1, 1, 2, 256>}]} {
    %c0 = arith.constant 0 : index
    %c0_0 = arith.constant 0 : index
    %c0_1 = arith.constant 0 : index
    %0 = vector.load %arg4[%c0, %c0_0, %c0_1] : memref<1x2x2xf32, #tpu.memory_space<vmem>>, vector<1x2x2xf32>
    %1 = vector.shape_cast %0 : vector<1x2x2xf32> to vector<2x2xf32>
    %c0_2 = arith.constant 0 : index
    %c0_3 = arith.constant 0 : index
    %c0_4 = arith.constant 0 : index
    %c0_5 = arith.constant 0 : index
    %2 = vector.load %arg3[%c0_2, %c0_3, %c0_4, %c0_5] : memref<1x1x2x256xf32, #tpu.memory_space<vmem>>, vector<1x1x2x256xf32>
    %3 = vector.shape_cast %2 : vector<1x1x2x256xf32> to vector<2x256xf32>
    %cst = arith.constant dense<0.000000e+00> : vector<2x256xf32>
    %4 = tpu.matmul %1, %3, %cst {dimension_numbers = #tpu.dot_dimension_numbers<[1], [0], [0], [1], [0, 0, 1, 1], [], []>} : vector<2x2xf32>, vector<2x256xf32>, vector<2x256xf32> -> vector<2x256xf32>
    %c0_6 = arith.constant 0 : index
    %c0_7 = arith.constant 0 : index
    %c0_8 = arith.constant 0 : index
    %c0_9 = arith.constant 0 : index
    %5 = vector.load %arg5[%c0_6, %c0_7, %c0_8, %c0_9] : memref<1x1x2x256xf32, #tpu.memory_space<vmem>>, vector<1x1x2x256xf32>
    %6 = vector.shape_cast %5 : vector<1x1x2x256xf32> to vector<2x256xf32>
    %7 = vector.shape_cast %4 : vector<2x256xf32> to vector<1x1x2x256xf32>
    tpu.vector_store %arg5[%c0_6, %c0_7, %c0_8, %c0_9], %7 {strides = array<i32>} : memref<1x1x2x256xf32, #tpu.memory_space<vmem>>, vector<1x1x2x256xf32>,
    return
  }
  func.func @transform_0(%arg0: i32, %arg1: i32, %arg2: i32) -> (i32, i32, i32, i32) {
    %c0_i32 = arith.constant 0 : i32
    %c0_i32_0 = arith.constant 0 : i32
    return %arg1, %arg0, %c0_i32, %arg2 : i32, i32, i32, i32
  }
  func.func @transform_1(%arg0: i32, %arg1: i32, %arg2: i32) -> (i32, i32, i32) {
    %c0_i32 = arith.constant 0 : i32
    %c0_i32_0 = arith.constant 0 : i32
    %c0_i32_1 = arith.constant 0 : i32
    return %arg0, %c0_i32, %c0_i32_0 : i32, i32, i32
  }
  func.func @transform_2(%arg0: i32, %arg1: i32, %arg2: i32) -> (i32, i32, i32, i32) {
    %c0_i32 = arith.constant 0 : i32
    %c0_i32_0 = arith.constant 0 : i32
    return %arg1, %arg0, %c0_i32, %arg2 : i32, i32, i32, i32
  }
}

</mosaic_0001>

<llo_original>
// kernel: tpu_custom_call.1
$region0: #{tpu_custom_call.1}
  #allocation0 [shape = 'u32[]', space=smem, size = 0x4, offset = 0x4, fixed_abs, tag = 'smem constant byte address 0x4 - core index']
  #allocation1 [shape = 'u32[72,128]{1,0:T(1,128)}', space=vmem, size = 0x9000, scoped, tag = 'internal scratch']
  %s0 = inlined_call_operand.hbm [shape: f32[2,2,2,256], index: 0, kind: input, shape index: {}]
  %s1 = inlined_call_operand.hbm [shape: f32[2,2,2], index: 1, kind: input, shape index: {}]
  %s2 = inlined_call_operand.hbm [shape: f32[2,2,2,256], index: 2, kind: output, shape index: {}]
  %s3 = sld [smem:[#allocation0]]
  $region49: #{tpu_custom_call.1} parent=0
    _
  %s5 = ssub.s32 1, %s3
  %s6 = scalar_select 0, %s5, %s3
  $region1: #{tpu_custom_call.1} parent=0
    #allocation2 [shape = 'u8[4096]{0}', space=vmem, size = 0x1000, scoped, tag = 'input window, operand 0']
    #allocation3 [shape = 's32[2]{0}', space=sflag, size = 0x8, scoped, tag = 'scoped memory for tpu_custom_call.1']
    #allocation4 [shape = 's32[2]{0}', space=sflag, size = 0x8, scoped, tag = 'scoped memory for tpu_custom_call.1']
    #allocation5 [shape = 'u8[2048]{0}', space=vmem, size = 0x800, scoped, tag = 'input window, operand 1']
    #allocation6 [shape = 's32[2]{0}', space=sflag, size = 0x8, scoped, tag = 'scoped memory for tpu_custom_call.1']
    #allocation7 [shape = 'u8[4096]{0}', space=vmem, size = 0x1000, scoped, tag = 'output window, operand 0']
    %7 = vsyncpa [#allocation3], 0
    %s8 = scalar_lea.sflag [#allocation3], 1
    %9 = vsyncpa %s8, 0
    %10 = vsyncpa [#allocation6], 0
    %s11 = scalar_lea.sflag [#allocation6], 1
    %12 = vsyncpa %s11, 0
    %13 = vsyncpa [#allocation4], 0
    %s14 = scalar_lea.sflag [#allocation4], 1
    %15 = vsyncpa %s14, 0
    loop: start=0, step=1, limit=6
    $region2: #{tpu_custom_call.1} parent=1 // loop_pre_header
      _
    $region3: #{tpu_custom_call.1} parent=1 // loop_header
      %s17 = sphi 0, %s21
      %p18 = scmp.ge.s32.totalorder %s17, 6
      %s24 = sphi 0, %s43
      %s25 = sphi 0, %s39
      %s26 = sphi 0, %s35
      %s27 = sphi 0, %s24
      %s28 = sphi 0, %s25
      %s29 = sphi 0, %s26
      %s30 = sphi 0, %s27
      %s31 = sphi 0, %s28
      %s32 = sphi 0, %s29
      %s50 = sphi 0, %s52
      %s53 = sphi 0, %s50
      %s54 = sphi 0, %s53
      %s70 = sphi 0, %s54
      %s76 = sphi 0, %s78
      %s79 = sphi 0, %s76
      %s80 = sphi 0, %s79
      %s96 = sphi 0, %s80
      %s106 = sphi 0, %s108
      %s109 = sphi 0, %s106
      %s110 = sphi 0, %s109
      %s126 = sphi 0, %s110
    $region4: #{tpu_custom_call.1} parent=1 // loop_header_branch
      %20 = sbr.rel (%p18) target = $region8
    $region5: #{tpu_custom_call.1} parent=1 // loop_body
      %s22 = ssub.s32 %s17, 1
      %s23 = ssub.s32 %s17, 2
      %s33 = sadd.s32 1, %s26
      %p34 = scmp.ge.s32.totalorder %s33, 1
      %s35 = scalar_select %p34, 0, %s33
      %s36 = sadd.s32 1, %s25
      %s37 = scalar_select %p34, %s36, %s25
      %p38 = scmp.ge.s32.totalorder %s37, 2
      %s39 = scalar_select %p38, 0, %s37
      %s40 = sadd.s32 1, %s24
      %s41 = scalar_select %p38, %s40, %s24
      %p42 = scmp.ge.s32.totalorder %s41, 2
      %s43 = scalar_select %p42, 0, %s41
      %s44 = ssub.s32 %s25, %s39
      %s45 = ssub.s32 %s24, %s43
      %s46 = sor.u32 %s44, %s45
      %s47 = ssub.s32 %s26, %s35
      %s48 = sor.u32 %s46, %s47
      %p49 = scmp.eq.s32.totalorder %s48, 0
      %s51 = sadd.s32 %s50, 1
      %s52 = scalar_select %p49, %s50, %s51
      %p55 = pneg %p49
      %p56 = scmp.eq.s32.totalorder %s17, 3
      %p57 = por %p55, %p56
      %p58 = scmp.ne.s32.totalorder %s50, %s53
      %p59 = scmp.eq.s32.totalorder %s17, 0
      %p60 = por %p58, %p59
      %p61 = scmp.ne.s32.totalorder %s50, %s53
      %p62 = scmp.eq.s32.totalorder %s22, 3
      %p63 = por %p61, %p62
      %p64 = scmp.ne.s32.totalorder %s53, %s54
      %p65 = scmp.eq.s32.totalorder %s22, 0
      %p66 = por %p64, %p65
      %p67 = scmp.ne.s32.totalorder %s53, %s54
      %p68 = scmp.eq.s32.totalorder %s23, 3
      %p69 = por %p67, %p68
      %p71 = scmp.ne.s32.totalorder %s54, %s70
      %p72 = scmp.eq.s32.totalorder %s23, 0
      %p73 = por %p71, %p72
      %s74 = ssub.s32 %s24, %s43
      %p75 = scmp.eq.s32.totalorder %s74, 0
      %s77 = sadd.s32 %s76, 1
      %s78 = scalar_select %p75, %s76, %s77
      %p81 = pneg %p75
      %p82 = scmp.eq.s32.totalorder %s17, 3
      %p83 = por %p81, %p82
      %p84 = scmp.ne.s32.totalorder %s76, %s79
      %p85 = scmp.eq.s32.totalorder %s17, 0
      %p86 = por %p84, %p85
      %p87 = scmp.ne.s32.totalorder %s76, %s79
      %p88 = scmp.eq.s32.totalorder %s22, 3
      %p89 = por %p87, %p88
      %p90 = scmp.ne.s32.totalorder %s79, %s80
      %p91 = scmp.eq.s32.totalorder %s22, 0
      %p92 = por %p90, %p91
      %p93 = scmp.ne.s32.totalorder %s79, %s80
      %p94 = scmp.eq.s32.totalorder %s23, 3
      %p95 = por %p93, %p94
      %p97 = scmp.ne.s32.totalorder %s80, %s96
      %p98 = scmp.eq.s32.totalorder %s23, 0
      %p99 = por %p97, %p98
      %s100 = ssub.s32 %s25, %s39
      %s101 = ssub.s32 %s24, %s43
      %s102 = sor.u32 %s100, %s101
      %s103 = ssub.s32 %s26, %s35
      %s104 = sor.u32 %s102, %s103
      %p105 = scmp.eq.s32.totalorder %s104, 0
      %s107 = sadd.s32 %s106, 1
      %s108 = scalar_select %p105, %s106, %s107
      %p111 = pneg %p105
      %p112 = scmp.eq.s32.totalorder %s17, 3
      %p113 = por %p111, %p112
      %p114 = scmp.ne.s32.totalorder %s106, %s109
      %p115 = scmp.eq.s32.totalorder %s17, 0
      %p116 = por %p114, %p115
      %p117 = scmp.ne.s32.totalorder %s106, %s109
      %p118 = scmp.eq.s32.totalorder %s22, 3
      %p119 = por %p117, %p118
      %p120 = scmp.ne.s32.totalorder %s109, %s110
      %p121 = scmp.eq.s32.totalorder %s22, 0
      %p122 = por %p120, %p121
      %p123 = scmp.ne.s32.totalorder %s109, %s110
      %p124 = scmp.eq.s32.totalorder %s23, 3
      %p125 = por %p123, %p124
      %p127 = scmp.ne.s32.totalorder %s110, %s126
      %p128 = scmp.eq.s32.totalorder %s23, 0
      %p129 = por %p127, %p128
      %p130 = scmp.le.s32.totalorder 1, %s17
      %p131 = scmp.lt.s32.totalorder %s17, 5
      %p132 = pnand %p130, %p131
      %p133 = pneg %p132
      // Predicated region
      $region9: #{tpu_custom_call.1} parent=5 // pred_check
        _
      $region10: #{tpu_custom_call.1} parent=5 // pred_check_branch
        %135 = sbr.rel (%p132) target = $region12
      $region11: #{tpu_custom_call.1} parent=5 // pred_region
        %s136 = ssub.s32 %s17, 1
      $region12: #{tpu_custom_call.1} parent=5 // pred_fallthru
        _
      %p137 = scmp.lt.s32.totalorder %s17, 4
      // Predicated region
      $region13: #{tpu_custom_call.1} parent=5 // pred_check
        %p138 = pneg %p137
      $region14: #{tpu_custom_call.1} parent=5 // pred_check_branch
        %140 = sbr.rel (%p138) target = $region16
      $region15: #{tpu_custom_call.1} parent=5 // pred_region
        // Predicated region
        $region17: #{tpu_custom_call.1} parent=15 // pred_check
          %p141 = pneg %p60
        $region18: #{tpu_custom_call.1} parent=15 // pred_check_branch
          %143 = sbr.rel (%p141) target = $region20
        $region19: #{tpu_custom_call.1} parent=15 // pred_region
          %s144 = sand.u32 %s50, 1
          %s145 = scalar_lea.sflag [#allocation3], %s144
          %s146 = sand.u32 %s50, 1
          %s147 = smul.addr %s146, 4
          %s148 = scalar_lea.vmem [#allocation2], %s147
          %s149 = smul.u32 2, %s26
          %151 = vsyncadd %s145, 0
          %s152 = smul.addr %s24, 2
          %s153 = sadd.s32 %s149, %s152
          %s154 = smul.addr %s25, 4
          %s155 = sadd.s32 %s153, %s154
          %s156 = smul.addr %s155, 2
          %s157 = scalar_lea.hbm %s0, %s156
          %s159 = sshll.u32 %s157, 4
          %s160 = int_to_ptr.hbm [resolvable:$true] %s159
          %s161 = sshll.u32 %s148, 4
          %s162 = int_to_ptr.vmem [resolvable:$true] %s161
          %164 = dma.hbm_to_vmem [thread:$0]  %s160, 64, %s162, %s145
        $region20: #{tpu_custom_call.1} parent=15 // pred_fallthru
          _
        // Predicated region
        $region21: #{tpu_custom_call.1} parent=15 // pred_check
          %p165 = pneg %p86
        $region22: #{tpu_custom_call.1} parent=15 // pred_check_branch
          %167 = sbr.rel (%p165) target = $region24
        $region23: #{tpu_custom_call.1} parent=15 // pred_region
          %s168 = sand.u32 %s76, 1
          %s169 = scalar_lea.sflag [#allocation6], %s168
          %s170 = sand.u32 %s76, 1
          %s171 = smul.addr %s170, 2
          %s172 = scalar_lea.vmem [#allocation5], %s171
          %174 = vsyncadd %s169, 0
          %s175 = smul.addr %s24, 2
          %s176 = scalar_lea.hbm %s1, %s175
          %s178 = sshll.u32 %s176, 4
          %s179 = int_to_ptr.hbm [resolvable:$true] %s178
          %s180 = sshll.u32 %s172, 4
          %s181 = int_to_ptr.vmem [resolvable:$true] %s180
          %183 = dma.hbm_to_vmem [thread:$0]  %s179, 32, %s181, %s169
        $region24: #{tpu_custom_call.1} parent=15 // pred_fallthru
          _
      $region16: #{tpu_custom_call.1} parent=5 // pred_fallthru
        _
      %p184 = scmp.le.s32.totalorder 1, %s17
      %p185 = scmp.lt.s32.totalorder %s17, 5
      %p186 = pnand %p184, %p185
      %p187 = pneg %p186
      // Predicated region
      $region25: #{tpu_custom_call.1} parent=5 // pred_check
        _
      $region26: #{tpu_custom_call.1} parent=5 // pred_check_branch
        %189 = sbr.rel (%p186) target = $region28
      $region27: #{tpu_custom_call.1} parent=5 // pred_region
        %s190 = ssub.s32 %s17, 1
        %s191 = sand.u32 %s53, 1
        %s192 = scalar_lea.sflag [#allocation3], %s191
        %s193 = sand.u32 %s53, 1
        %s194 = smul.addr %s193, 4
        %s195 = scalar_lea.vmem [#allocation2], %s194
        // Predicated region
        $region29: #{tpu_custom_call.1} parent=27 // pred_check
          %p196 = pneg %p66
        $region30: #{tpu_custom_call.1} parent=27 // pred_check_branch
          %198 = sbr.rel (%p196) target = $region32
        $region31: #{tpu_custom_call.1} parent=27 // pred_region
          %200 = dma.done %s192, 64
        $region32: #{tpu_custom_call.1} parent=27 // pred_fallthru
          _
        %s201 = sand.u32 %s79, 1
        %s202 = scalar_lea.sflag [#allocation6], %s201
        %s203 = sand.u32 %s79, 1
        %s204 = smul.addr %s203, 2
        %s205 = scalar_lea.vmem [#allocation5], %s204
        // Predicated region
        $region33: #{tpu_custom_call.1} parent=27 // pred_check
          %p206 = pneg %p92
        $region34: #{tpu_custom_call.1} parent=27 // pred_check_branch
          %208 = sbr.rel (%p206) target = $region36
        $region35: #{tpu_custom_call.1} parent=27 // pred_region
          %210 = dma.done %s202, 32
        $region36: #{tpu_custom_call.1} parent=27 // pred_fallthru
          _
        %s211 = sand.u32 %s53, 1
        %s212 = scalar_lea.sflag [#allocation3], %s211
        %s213 = sand.u32 %s53, 1
        %s214 = smul.addr %s213, 4
        %s215 = scalar_lea.vmem [#allocation2], %s214
        %p216 = pneg %p66
        %p217 = pneg %p63
        %s218 = sand.u32 %s79, 1
        %s219 = scalar_lea.sflag [#allocation6], %s218
        %s220 = sand.u32 %s79, 1
        %s221 = smul.addr %s220, 2
        %s222 = scalar_lea.vmem [#allocation5], %s221
        %p223 = pneg %p92
        %p224 = pneg %p89
        %p225 = pneg %p122
        %p226 = pneg %p119
        %s227 = sand.u32 %s109, 1
        %s228 = scalar_lea.sflag [#allocation4], %s227
        %s229 = sand.u32 %s109, 1
        %s230 = smul.addr %s229, 4
        %s231 = scalar_lea.vmem [#allocation7], %s230
        %s232 = smul.u32 2, %s29
        %s233 = smul.u32 2, %s29
        %v234 = vld [vmem:[%s205] sm:$0x3]
        %v235 = vld [vmem:[%s195] sm:$0xf]
        %237 = vst [vmem:[#allocation1] ss:$4 sm:$0xff] %v235
        %v238 = vld.sshfl [vmem:[#allocation1] sm:$0xff pattern:$0x73625140]
        %v239 = vld.sshfl [vmem:[#allocation1 + $0x8] sm:$0xff pattern:$0x73625140]
        %vm240 = vcmask 15360
        %v242 = vsel %vm240, %v234, 0
        %vm244 = vcmask 1041408
        %v245 = vsel %vm244, %v238, 0
        %v247 = vsel %vm244, %v239, 0
        %249 = vmatpush.msra.mxu0 0.0
        %250 = vmatpush.msra.mxu0 0.0
        %251 = vmatpush.msra.mxu0 0.0
        %252 = vmatpush.msra.mxu0 0.0
        %253 = vmatpush.msra.mxu0 0.0
        %254 = vmatpush.msra.mxu0 0.0
        %255 = vmatpush.msra.mxu0 0.0
        %256 = vmatpush.msra.mxu0 0.0
        %257 = vmatpush.msra.mxu0 0.0
        %258 = vmatpush.msra.mxu0 0.0
        %259 = vmatpush.msra.mxu0 0.0
        %260 = vmatpush.msra.mxu0 0.0
        %261 = vmatpush.msra.mxu0 0.0
        %262 = vmatpush.msra.mxu0 0.0
        %263 = vmatpush.msra.mxu0 0.0
        %264 = vmatpush.msra.mxu0 %v245
        %265 = vmatmul.f32.gmra.mxu0 %v242
        %v266 = vpop.f32.mrf.mxu0
        %v267 = vadd.f32 0.0, %v266
        %268 = vdwg.mxu0
        %269 = vmatpush.msra.mxu0 0.0
        %270 = vmatpush.msra.mxu0 0.0
        %271 = vmatpush.msra.mxu0 0.0
        %272 = vmatpush.msra.mxu0 0.0
        %273 = vmatpush.msra.mxu0 0.0
        %274 = vmatpush.msra.mxu0 0.0
        %275 = vmatpush.msra.mxu0 0.0
        %276 = vmatpush.msra.mxu0 0.0
        %277 = vmatpush.msra.mxu0 0.0
        %278 = vmatpush.msra.mxu0 0.0
        %279 = vmatpush.msra.mxu0 0.0
        %280 = vmatpush.msra.mxu0 0.0
        %281 = vmatpush.msra.mxu0 0.0
        %282 = vmatpush.msra.mxu0 0.0
        %283 = vmatpush.msra.mxu0 0.0
        %284 = vmatpush.msra.mxu0 %v247
        %285 = vmatmul.f32.gmra.mxu0 %v242
        %v286 = vpop.f32.mrf.mxu0
        %v287 = vadd.f32 0.0, %v286
        %288 = vdwg.mxu0
        %v291 = vrot.slane %v287, 6
        %v292 = vsel %vm244, %v267, %v291
        %294 = vst [vmem:[%s231] sm:$0xf] %v292
        %s295 = sand.u32 %s109, 1
        %s296 = scalar_lea.sflag [#allocation4], %s295
        %s297 = sand.u32 %s109, 1
        %s298 = smul.addr %s297, 4
        %s299 = scalar_lea.vmem [#allocation7], %s298
        // Predicated region
        $region37: #{tpu_custom_call.1} parent=27 // pred_check
          %p300 = pneg %p119
        $region38: #{tpu_custom_call.1} parent=27 // pred_check_branch
          %302 = sbr.rel (%p300) target = $region40
        $region39: #{tpu_custom_call.1} parent=27 // pred_region
          %s303 = smul.u32 2, %s29
          %305 = vsyncadd %s296, 0
          %s306 = smul.addr %s27, 2
          %s307 = sadd.s32 %s303, %s306
          %s308 = smul.addr %s28, 4
          %s309 = sadd.s32 %s307, %s308
          %s310 = smul.addr %s309, 2
          %s311 = scalar_lea.hbm %s2, %s310
          %s313 = sshll.u32 %s299, 4
          %s314 = int_to_ptr.vmem [resolvable:$true] %s313
          %s315 = sshll.u32 %s311, 4
          %s316 = int_to_ptr.hbm [resolvable:$true] %s315
          %318 = dma.vmem_to_hbm [thread:$0]  %s314, 64, %s316, %s296
        $region40: #{tpu_custom_call.1} parent=27 // pred_fallthru
          _
      $region28: #{tpu_custom_call.1} parent=5 // pred_fallthru
        _
      %p319 = scmp.le.s32.totalorder 2, %s17
      // Predicated region
      $region41: #{tpu_custom_call.1} parent=5 // pred_check
        %p320 = pneg %p319
      $region42: #{tpu_custom_call.1} parent=5 // pred_check_branch
        %322 = sbr.rel (%p320) target = $region44
      $region43: #{tpu_custom_call.1} parent=5 // pred_region
        %s323 = ssub.s32 %s17, 2
        // Predicated region
        $region45: #{tpu_custom_call.1} parent=43 // pred_check
          %p324 = pneg %p125
        $region46: #{tpu_custom_call.1} parent=43 // pred_check_branch
          %326 = sbr.rel (%p324) target = $region48
        $region47: #{tpu_custom_call.1} parent=43 // pred_region
          %s327 = sand.u32 %s110, 1
          %s328 = scalar_lea.sflag [#allocation4], %s327
          %s329 = sand.u32 %s110, 1
          %s330 = smul.addr %s329, 4
          %s331 = scalar_lea.vmem [#allocation7], %s330
          %333 = dma.done %s328, 64
        $region48: #{tpu_custom_call.1} parent=43 // pred_fallthru
          _
      $region44: #{tpu_custom_call.1} parent=5 // pred_fallthru
        _
    $region6: #{tpu_custom_call.1} parent=1 // loop_footer
      %s21 = sadd.s32 1, %s17
    $region7: #{tpu_custom_call.1} parent=1 // loop_footer_branch
      %16 = sbr.rel target = $region3
    $region8: #{tpu_custom_call.1} parent=1 // loop_exit
      _
    %334 = vsyncpa [#allocation3], 1
    %s335 = scalar_lea.sflag [#allocation3], 1
    %336 = vsyncpa %s335, 1
    %337 = vsyncpa [#allocation6], 1
    %s338 = scalar_lea.sflag [#allocation6], 1
    %339 = vsyncpa %s338, 1
    %340 = vsyncpa [#allocation4], 1
    %s341 = scalar_lea.sflag [#allocation4], 1
    %342 = vsyncpa %s341, 1

</llo_original>
